<compile_context>
chip_gen: v7x
topology: tpu7x:2x2x1
jax: 0.10.0
libtpu: 0.0.40
codegen_flags: <defaults>
</compile_context>

<pallas_src>
import functools
import math

import jax
import jax.numpy as jnp
from jax.experimental import pallas as pl
from jax.experimental.pallas import tpu as pltpu


def _label_smoothing_kernel(x_ref, t_ref, o_ref, *, n_rows, row_tile,
                            padding_idx, confidence, smooth_val,
                            entropy_const):
    x = x_ref[...]                                   # (tn, V) log-probs, native dtype
    t = t_ref[...]                                   # (tn, 1) int32 targets

    cols = jax.lax.broadcasted_iota(jnp.int32, x.shape, 1)          # column ids
    rows = (pl.program_id(0) * row_tile
            + jax.lax.broadcasted_iota(jnp.int32, t.shape, 0))      # global row ids

    zero = jnp.zeros((), x.dtype)
    # true_dist[:, padding_idx] = 0: zero that column of x up front.  This also
    # guards a -inf log-prob in the padding column (its contribution must be 0).
    x_masked = jnp.where(cols == padding_idx, zero, x)
    tgt_mask = cols == t

    # Cross term sum_j td_j * x_j, with td = {confidence at target, 0 at padding,
    # smooth_val elsewhere}.  Branches are on Python-time constants so no
    # 0 * (-inf) -> NaN is ever formed when smoothing is 0.0 or 1.0.
    if confidence > 0.0:
        t_pick = jnp.sum(jnp.where(tgt_mask, x_masked, zero).astype(jnp.float32),
                         axis=-1, keepdims=True)                    # x[i, target]
        if smooth_val > 0.0:
            row_sum = jnp.sum(x_masked.astype(jnp.float32),
                              axis=-1, keepdims=True)
            cross = (jnp.float32(smooth_val) * row_sum
                     + jnp.float32(confidence - smooth_val) * t_pick)
        else:  # smoothing == 0.0: only the target column carries weight
            cross = jnp.float32(confidence) * t_pick
    else:      # smoothing == 1.0: target column has zero weight, exclude it too
        rest = jnp.where(tgt_mask, zero, x_masked)
        cross = jnp.float32(smooth_val) * jnp.sum(rest.astype(jnp.float32),
                                                  axis=-1, keepdims=True)

    # Rows past n_rows (partial last tile) and rows whose target is the padding
    # index contribute exactly zero (the index_fill_ path).  Select-based mask so
    # garbage/NaN in the unselected branch never propagates.
    valid = jnp.logical_and(rows < n_rows, t != padding_idx)        # (tn, 1)
    row_loss = jnp.where(valid, jnp.float32(entropy_const) - cross, 0.0)

    o_ref[...] = jnp.sum(row_loss).reshape(1, 1, 1)                 # per-block partial


def _vmem_capacity_bytes():
    try:
        return int(pltpu.get_tpu_info().vmem_capacity_bytes)
    except Exception:
        return 64 * 1024 * 1024    # conservative (v7x-sized) fallback


def label_smoothing_loss(x, target, *, size, padding_idx, smoothing=0.0,
                         row_tile=None):
    """x: (N, size) float log-probs; target: (N,) int labels. Returns scalar f32."""
    assert x.shape[1] == size
    N = x.shape[0]

    confidence = 1.0 - smoothing
    if size == 2:
        # smoothing/(size-2) divides by zero exactly like the PyTorch module.
        assert smoothing == 0.0, "size==2 with smoothing>0 is undefined (div by zero)"
        smooth_val = 0.0
    else:
        smooth_val = smoothing / (size - 2)

    # Entropy term sum_j td_j*log(td_j) is the same constant for every valid row.
    conf_ent = confidence * math.log(confidence) if confidence > 0.0 else 0.0
    smooth_ent = smooth_val * math.log(smooth_val) if smooth_val > 0.0 else 0.0
    entropy_const = conf_ent + (size - 2) * smooth_ent

    vmem_cap = _vmem_capacity_bytes()
    # <= 3/4 of physical VMEM so double-buffered inputs + elementwise temporaries
    # (int32 iota, masks, f32 reduce converts) keep headroom even on v7x's 64 MiB.
    vmem_limit = min(int(vmem_cap * 3 // 4), 96 * 1024 * 1024)

    if row_tile is None:
        # Per-buffer x budget ~ VMEM/16: ~8 MiB on 128 MiB parts (v5e/v6e),
        # ~4 MiB on v7x.  No artificial row cap: purely byte-budget driven.
        tile_target_bytes = max(2 * 1024 * 1024, vmem_cap // 16)
        bytes_per_row = size * jnp.dtype(x.dtype).itemsize
        row_tile = max(8, tile_target_bytes // max(bytes_per_row, 1))
    row_tile = max(8, (row_tile // 8) * 8)                 # sublane aligned
    # Guarantee >= 2 blocks (when N > 8) so the "parallel" grid axis actually
    # splits across v7x's two TensorCores; harmless on single-TC v5e/v6e.
    half_up = max(8, ((pl.cdiv(N, 2) + 7) // 8) * 8)
    row_tile = min(row_tile, half_up)
    num_blocks = pl.cdiv(N, row_tile)

    t2d = target.astype(jnp.int32).reshape(N, 1)

    kernel = functools.partial(
        _label_smoothing_kernel,
        n_rows=N, row_tile=row_tile, padding_idx=padding_idx,
        confidence=confidence, smooth_val=smooth_val,
        entropy_const=entropy_const)

    partials = pl.pallas_call(
        kernel,
        out_shape=jax.ShapeDtypeStruct((num_blocks, 1, 1), jnp.float32),
        grid_spec=pltpu.PrefetchScalarGridSpec(
            num_scalar_prefetch=0,
            grid=(num_blocks,),
            in_specs=[
                pl.BlockSpec((row_tile, size), lambda i: (i, 0)),
                pl.BlockSpec((row_tile, 1), lambda i: (i, 0)),
            ],
            out_specs=pl.BlockSpec((1, 1, 1), lambda i: (i, 0, 0)),
        ),
        compiler_params=pltpu.CompilerParams(
            dimension_semantics=("parallel",),
            vmem_limit_bytes=vmem_limit),
    )(x, t2d)

    return jnp.sum(partials)


def _reference_loss(x, target, *, size, padding_idx, smoothing):
    """Pure-JAX reference mirroring the PyTorch forward (with explicit log)."""
    confidence = 1.0 - smoothing
    N = x.shape[0]
    cols = jnp.arange(size)[None, :]
    fill = smoothing / (size - 2) if size != 2 else 0.0
    td = jnp.full((N, size), fill, jnp.float32)
    td = jnp.where(cols == target[:, None], confidence, td)
    td = jnp.where(cols == padding_idx, 0.0, td)
    td = jnp.where(target[:, None] == padding_idx, 0.0, td)
    safe = jnp.where(td > 0, td, 1.0)
    return jnp.sum(jnp.where(td > 0, td * (jnp.log(safe) - x), 0.0))


if __name__ == "__main__":
    # Module params (deterministic, synthetic): size=32 vocab, padding_idx=0,
    # smoothing=0.1.  Inputs: N=16 rows of log-probabilities, int targets.
    size = 32
    padding_idx = 0
    smoothing = 0.1
    N = 16

    key = jax.random.PRNGKey(0)
    k_x, k_t = jax.random.split(key)
    logits = jax.random.normal(k_x, (N, size), dtype=jnp.float32)
    x = jax.nn.log_softmax(logits, axis=-1)          # KLDivLoss expects log-probs
    target = jax.random.randint(k_t, (N,), 0, size, dtype=jnp.int32)
    # ensure at least one padding row exercises the index_fill_ path
    target = target.at[3].set(padding_idx)

    loss = label_smoothing_loss(x, target, size=size, padding_idx=padding_idx,
                                smoothing=smoothing)
    loss = jax.block_until_ready(loss)
    ref = _reference_loss(x, target, size=size, padding_idx=padding_idx,
                          smoothing=smoothing)
    assert jnp.allclose(loss, ref, rtol=1e-5, atol=1e-4), (loss, ref)

    # Ragged case: N not a multiple of the row tile exercises the in-kernel
    # partial-tile masking path.
    N2 = 13
    x2 = x[:N2]
    t2 = target[:N2]
    loss2 = label_smoothing_loss(x2, t2, size=size, padding_idx=padding_idx,
                                 smoothing=smoothing, row_tile=8)
    loss2 = jax.block_until_ready(loss2)
    ref2 = _reference_loss(x2, t2, size=size, padding_idx=padding_idx,
                           smoothing=smoothing)
    assert jnp.allclose(loss2, ref2, rtol=1e-5, atol=1e-4), (loss2, ref2)

    # smoothing == 0.0 with a -inf log-prob in a zero-weight column: reference is
    # finite (td>0 mask); kernel must not produce NaN/inf (0*(-inf) guard).
    x3 = x.at[5, 7].set(-jnp.inf)
    t3 = target.at[5].set(2)     # target != 7, != padding
    loss3 = label_smoothing_loss(x3, t3, size=size, padding_idx=padding_idx,
                                 smoothing=0.0)
    loss3 = jax.block_until_ready(loss3)
    ref3 = _reference_loss(x3, t3, size=size, padding_idx=padding_idx,
                           smoothing=0.0)
    assert bool(jnp.isfinite(loss3)), loss3
    assert jnp.allclose(loss3, ref3, rtol=1e-5, atol=1e-4), (loss3, ref3)

    print("KERNEL_OK")
</pallas_src>

<mosaic_0001>
module attributes {stable_mosaic.version = 11 : i64} {
  func.func @_label_smoothing_kernel(%arg0: i32, %arg1: memref<8x32xf32, #tpu.memory_space<vmem>>, %arg2: memref<8x1xi32, #tpu.memory_space<vmem>>, %arg3: memref<1x1x1xf32, #tpu.memory_space<vmem>>) attributes {dimension_semantics = [#tpu.dimension_semantics<parallel>], iteration_bounds = array<i64: 2>, scalar_prefetch = 0 : i64, scratch_operands = 0 : i64, tpu.core_type = #tpu.core_type<tc>, window_params = [{transform_indices = @transform_0, window_bounds = array<i64: 8, 32>}, {transform_indices = @transform_1, window_bounds = array<i64: 8, 1>}, {transform_indices = @transform_2, window_bounds = array<i64: 1, 1, 1>}]} {
    %c0 = arith.constant 0 : index
    %c0_0 = arith.constant 0 : index
    %0 = vector.load %arg1[%c0, %c0_0] : memref<8x32xf32, #tpu.memory_space<vmem>>, vector<8x32xf32>
    %c0_1 = arith.constant 0 : index
    %c0_2 = arith.constant 0 : index
    %1 = vector.load %arg2[%c0_1, %c0_2] : memref<8x1xi32, #tpu.memory_space<vmem>>, vector<8x1xi32>
    %2 = tpu.iota {dimensions = array<i32: 1>} : vector<8x32xi32>
    %c8_i32 = arith.constant 8 : i32
    %3 = arith.muli %arg0, %c8_i32 : i32
    %4 = tpu.iota {dimensions = array<i32: 0>} : vector<8x1xi32>
    %5 = vector.broadcast %3 : i32 to vector<8x1xi32>
    %6 = arith.addi %5, %4 : vector<8x1xi32>
    %c0_i32 = arith.constant 0 : i32
    %7 = vector.broadcast %c0_i32 : i32 to vector<8x32xi32>
    %8 = arith.cmpi eq, %2, %7 : vector<8x32xi32>
    %cst = arith.constant 0.000000e+00 : f32
    %9 = vector.broadcast %cst : f32 to vector<8x32xf32>
    %10 = arith.select %8, %9, %0 : vector<8x32xi1>, vector<8x32xf32>
    %11 = vector.broadcast %1 : vector<8x1xi32> to vector<8x32xi32>
    %12 = arith.cmpi eq, %2, %11 : vector<8x32xi32>
    %cst_3 = arith.constant 0.000000e+00 : f32
    %13 = vector.broadcast %cst_3 : f32 to vector<8x32xf32>
    %14 = arith.select %12, %10, %13 : vector<8x32xi1>, vector<8x32xf32>
    %cst_4 = arith.constant dense<0.000000e+00> : vector<8xf32>
    %15 = vector.multi_reduction <add>, %14, %cst_4 [1] : vector<8x32xf32> to vector<8xf32>
    %16 = vector.shape_cast %15 : vector<8xf32> to vector<8x1xf32>
    %cst_5 = arith.constant dense<0.000000e+00> : vector<8xf32>
    %17 = vector.multi_reduction <add>, %10, %cst_5 [1] : vector<8x32xf32> to vector<8xf32>
    %18 = vector.shape_cast %17 : vector<8xf32> to vector<8x1xf32>
    %cst_6 = arith.constant 0.00333333341 : f32
    %19 = vector.broadcast %cst_6 : f32 to vector<8x1xf32>
    %20 = arith.mulf %19, %18 : vector<8x1xf32>
    %cst_7 = arith.constant 0.896666646 : f32
    %21 = vector.broadcast %cst_7 : f32 to vector<8x1xf32>
    %22 = arith.mulf %21, %16 : vector<8x1xf32>
    %23 = arith.addf %20, %22 : vector<8x1xf32>
    %c16_i32 = arith.constant 16 : i32
    %24 = vector.broadcast %c16_i32 : i32 to vector<8x1xi32>
    %25 = arith.cmpi slt, %6, %24 : vector<8x1xi32>
    %c0_i32_8 = arith.constant 0 : i32
    %26 = vector.broadcast %c0_i32_8 : i32 to vector<8x1xi32>
    %27 = arith.cmpi ne, %1, %26 : vector<8x1xi32>
    %28 = arith.andi %25, %27 : vector<8x1xi1>
    %cst_9 = arith.constant -0.665202737 : f32
    %29 = vector.broadcast %cst_9 : f32 to vector<8x1xf32>
    %30 = arith.subf %29, %23 : vector<8x1xf32>
    %cst_10 = arith.constant 0.000000e+00 : f32
    %31 = vector.broadcast %cst_10 : f32 to vector<8x1xf32>
    %32 = arith.select %28, %30, %31 : vector<8x1xi1>, vector<8x1xf32>
    %33 = vector.shape_cast %32 : vector<8x1xf32> to vector<1x8x1xf32>
    %cst_11 = arith.constant dense<0.000000e+00> : vector<1xf32>
    %34 = vector.multi_reduction <add>, %33, %cst_11 [1, 2] : vector<1x8x1xf32> to vector<1xf32>
    %35 = vector.shape_cast %34 : vector<1xf32> to vector<1x1x1xf32>
    %36 = vector.extract %35[0, 0, 0] : f32 from vector<1x1x1xf32>
    %37 = vector.broadcast %36 : f32 to vector<1x1x1xf32>
    %c0_12 = arith.constant 0 : index
    %c0_13 = arith.constant 0 : index
    %c0_14 = arith.constant 0 : index
    %38 = vector.load %arg3[%c0_12, %c0_13, %c0_14] : memref<1x1x1xf32, #tpu.memory_space<vmem>>, vector<1x1x1xf32>
    tpu.vector_store %arg3[%c0_12, %c0_13, %c0_14], %37 {strides = array<i32>} : memref<1x1x1xf32, #tpu.memory_space<vmem>>, vector<1x1x1xf32>,
    return
  }
  func.func @transform_0(%arg0: i32) -> (i32, i32) {
    %c0_i32 = arith.constant 0 : i32
    %c0_i32_0 = arith.constant 0 : i32
    return %arg0, %c0_i32 : i32, i32
  }
  func.func @transform_1(%arg0: i32) -> (i32, i32) {
    %c0_i32 = arith.constant 0 : i32
    %c0_i32_0 = arith.constant 0 : i32
    return %arg0, %c0_i32 : i32, i32
  }
  func.func @transform_2(%arg0: i32) -> (i32, i32, i32) {
    %c0_i32 = arith.constant 0 : i32
    %c0_i32_0 = arith.constant 0 : i32
    %c0_i32_1 = arith.constant 0 : i32
    return %arg0, %c0_i32, %c0_i32_0 : i32, i32, i32
  }
}

</mosaic_0001>

<llo_original>
// kernel: tpu_custom_call.1
$region0: #{tpu_custom_call.1}
  #allocation0 [shape = 'u32[]', space=smem, size = 0x4, offset = 0x4, fixed_abs, tag = 'smem constant byte address 0x4 - core index']
  #allocation1 [shape = 'u32[144,128]{1,0:T(1,128)}', space=vmem, size = 0x12000, scoped, tag = 'internal scratch']
  %s0 = inlined_call_operand.vmem [shape: f32[16,32], index: 0, kind: input, shape index: {}]
  %s1 = inlined_call_operand.vmem [shape: s32[16,1], index: 1, kind: input, shape index: {}]
  %s2 = inlined_call_operand.vmem [shape: f32[2,1,1], index: 2, kind: output, shape index: {}]
  %s3 = sld [smem:[#allocation0]]
  $region41: #{tpu_custom_call.1} parent=0
    _
  %s5 = ssub.s32 1, %s3
  %s6 = scalar_select 0, %s5, %s3
  loop: start=0, step=1, limit=4
  $region2: #{tpu_custom_call.1} parent=0 // loop_pre_header
    _
  $region3: #{tpu_custom_call.1} parent=0 // loop_header
    %s8 = sphi 0, %s12
    %p9 = scmp.ge.s32.totalorder %s8, 4
    %s18 = sphi 0, %s20
    %s21 = sphi 0, %s18
    %s22 = sphi 0, %s21
    %s38 = sphi 0, %s22
    %s44 = sphi 0, %s46
    %s47 = sphi 0, %s44
    %s48 = sphi 0, %s47
    %s64 = sphi 0, %s48
    %s70 = sphi 0, %s72
    %s73 = sphi 0, %s70
    %s74 = sphi 0, %s73
    %s90 = sphi 0, %s74
  $region4: #{tpu_custom_call.1} parent=0 // loop_header_branch
    %11 = sbr.rel (%p9) target = $region8
  $region5: #{tpu_custom_call.1} parent=0 // loop_body
    %s13 = ssub.s32 %s8, 1
    %s14 = ssub.s32 %s8, 2
    %s15 = sadd.s32 %s8, 1
    %s16 = ssub.s32 %s8, %s15
    %p17 = scmp.eq.s32.totalorder %s16, 0
    %s19 = sadd.s32 %s18, 1
    %s20 = scalar_select %p17, %s18, %s19
    %p23 = pneg %p17
    %p24 = scmp.eq.s32.totalorder %s8, 1
    %p25 = por %p23, %p24
    %p26 = scmp.ne.s32.totalorder %s18, %s21
    %p27 = scmp.eq.s32.totalorder %s8, 0
    %p28 = por %p26, %p27
    %p29 = scmp.ne.s32.totalorder %s18, %s21
    %p30 = scmp.eq.s32.totalorder %s13, 1
    %p31 = por %p29, %p30
    %p32 = scmp.ne.s32.totalorder %s21, %s22
    %p33 = scmp.eq.s32.totalorder %s13, 0
    %p34 = por %p32, %p33
    %p35 = scmp.ne.s32.totalorder %s21, %s22
    %p36 = scmp.eq.s32.totalorder %s14, 1
    %p37 = por %p35, %p36
    %p39 = scmp.ne.s32.totalorder %s22, %s38
    %p40 = scmp.eq.s32.totalorder %s14, 0
    %p41 = por %p39, %p40
    %s42 = ssub.s32 %s8, %s15
    %p43 = scmp.eq.s32.totalorder %s42, 0
    %s45 = sadd.s32 %s44, 1
    %s46 = scalar_select %p43, %s44, %s45
    %p49 = pneg %p43
    %p50 = scmp.eq.s32.totalorder %s8, 1
    %p51 = por %p49, %p50
    %p52 = scmp.ne.s32.totalorder %s44, %s47
    %p53 = scmp.eq.s32.totalorder %s8, 0
    %p54 = por %p52, %p53
    %p55 = scmp.ne.s32.totalorder %s44, %s47
    %p56 = scmp.eq.s32.totalorder %s13, 1
    %p57 = por %p55, %p56
    %p58 = scmp.ne.s32.totalorder %s47, %s48
    %p59 = scmp.eq.s32.totalorder %s13, 0
    %p60 = por %p58, %p59
    %p61 = scmp.ne.s32.totalorder %s47, %s48
    %p62 = scmp.eq.s32.totalorder %s14, 1
    %p63 = por %p61, %p62
    %p65 = scmp.ne.s32.totalorder %s48, %s64
    %p66 = scmp.eq.s32.totalorder %s14, 0
    %p67 = por %p65, %p66
    %s68 = ssub.s32 %s8, %s15
    %p69 = scmp.eq.s32.totalorder %s68, 0
    %s71 = sadd.s32 %s70, 1
    %s72 = scalar_select %p69, %s70, %s71
    %p75 = pneg %p69
    %p76 = scmp.eq.s32.totalorder %s8, 1
    %p77 = por %p75, %p76
    %p78 = scmp.ne.s32.totalorder %s70, %s73
    %p79 = scmp.eq.s32.totalorder %s8, 0
    %p80 = por %p78, %p79
    %p81 = scmp.ne.s32.totalorder %s70, %s73
    %p82 = scmp.eq.s32.totalorder %s13, 1
    %p83 = por %p81, %p82
    %p84 = scmp.ne.s32.totalorder %s73, %s74
    %p85 = scmp.eq.s32.totalorder %s13, 0
    %p86 = por %p84, %p85
    %p87 = scmp.ne.s32.totalorder %s73, %s74
    %p88 = scmp.eq.s32.totalorder %s14, 1
    %p89 = por %p87, %p88
    %p91 = scmp.ne.s32.totalorder %s74, %s90
    %p92 = scmp.eq.s32.totalorder %s14, 0
    %p93 = por %p91, %p92
    %p94 = scmp.le.s32.totalorder 1, %s8
    %p95 = scmp.lt.s32.totalorder %s8, 3
    %p96 = pnand %p94, %p95
    %p97 = pneg %p96
    // Predicated region
    $region9: #{tpu_custom_call.1} parent=5 // pred_check
      _
    $region10: #{tpu_custom_call.1} parent=5 // pred_check_branch
      %99 = sbr.rel (%p96) target = $region12
    $region11: #{tpu_custom_call.1} parent=5 // pred_region
      %s100 = ssub.s32 %s8, 1
    $region12: #{tpu_custom_call.1} parent=5 // pred_fallthru
      _
    %p101 = scmp.lt.s32.totalorder %s8, 2
    // Predicated region
    $region13: #{tpu_custom_call.1} parent=5 // pred_check
      %p102 = pneg %p101
    $region14: #{tpu_custom_call.1} parent=5 // pred_check_branch
      %104 = sbr.rel (%p102) target = $region16
    $region15: #{tpu_custom_call.1} parent=5 // pred_region
      // Predicated region
      $region17: #{tpu_custom_call.1} parent=15 // pred_check
        %p105 = pneg %p28
      $region18: #{tpu_custom_call.1} parent=15 // pred_check_branch
        %107 = sbr.rel (%p105) target = $region20
      $region19: #{tpu_custom_call.1} parent=15 // pred_region
        %p108 = scmp.lt.s32.totalorder %s8, 1
        %s109 = scalar_select %p108, %s8, 1
        %s110 = smul.addr %s109, 8
        %s111 = scalar_lea.vmem %s0, %s110
      $region20: #{tpu_custom_call.1} parent=15 // pred_fallthru
        _
      // Predicated region
      $region21: #{tpu_custom_call.1} parent=15 // pred_check
        %p112 = pneg %p54
      $region22: #{tpu_custom_call.1} parent=15 // pred_check_branch
        %114 = sbr.rel (%p112) target = $region24
      $region23: #{tpu_custom_call.1} parent=15 // pred_region
        %p115 = scmp.lt.s32.totalorder %s8, 1
        %s116 = scalar_select %p115, %s8, 1
        %s117 = smul.addr %s116, 8
        %s118 = scalar_lea.vmem %s1, %s117
      $region24: #{tpu_custom_call.1} parent=15 // pred_fallthru
        _
    $region16: #{tpu_custom_call.1} parent=5 // pred_fallthru
      _
    %p119 = scmp.le.s32.totalorder 1, %s8
    %p120 = scmp.lt.s32.totalorder %s8, 3
    %p121 = pnand %p119, %p120
    %p122 = pneg %p121
    // Predicated region
    $region25: #{tpu_custom_call.1} parent=5 // pred_check
      _
    $region26: #{tpu_custom_call.1} parent=5 // pred_check_branch
      %124 = sbr.rel (%p121) target = $region28
    $region27: #{tpu_custom_call.1} parent=5 // pred_region
      %s125 = ssub.s32 %s8, 1
      %p126 = scmp.lt.s32.totalorder %s13, 1
      %s127 = scalar_select %p126, %s13, 1
      %s128 = smul.addr %s127, 8
      %s129 = scalar_lea.vmem %s0, %s128
      %p130 = pneg %p34
      %p131 = pneg %p31
      %p132 = scmp.lt.s32.totalorder %s13, 1
      %s133 = scalar_select %p132, %s13, 1
      %s134 = smul.addr %s133, 8
      %s135 = scalar_lea.vmem %s1, %s134
      %p136 = pneg %p60
      %p137 = pneg %p57
      %p138 = pneg %p86
      %p139 = pneg %p83
      %p140 = scmp.lt.s32.totalorder %s13, 1
      %s141 = scalar_select %p140, %s13, 1
      %s142 = scalar_lea.vmem %s2, %s141
      %p143 = scmp.lt.s32.totalorder %s13, 1
      %s144 = scalar_select %p143, %s13, 1
      %s145 = smul.addr %s144, 8
      %s146 = scalar_lea.vmem %s0, %s145
      %p147 = scmp.lt.s32.totalorder %s13, 1
      %s148 = scalar_select %p147, %s13, 1
      %s149 = smul.addr %s148, 8
      %s150 = scalar_lea.vmem %s1, %s149
      %p151 = scmp.lt.s32.totalorder %s13, 1
      %s152 = scalar_select %p151, %s13, 1
      %s153 = scalar_lea.vmem %s2, %s152
      %v154 = vld [vmem:[%s146] sm:$0xff]
      %v155 = vld [vmem:[%s150] sm:$0xff]
      %v156 = vlaneseq
      %v157 = vand.u32 %v156, 127
      %s158 = smul.u32 %s13, 8
      %v159 = vlaneseq
      %v160 = vshrl.u32 %v159, 7
      %v161 = vstv %s158
      %v162 = vadd.s32 %v161, %v160
      %vm163 = vcmp.eq.s32.totalorder %v157, 0
      %v164 = vsel %vm163, 0.0, %v154
      %165 = vset.pattern.permute.xlu0 0
      %166 = vperm.xlu0 %165, %v155
      %v167 = vpop.permute.xlu0 %166
      %vm168 = vcmp.eq.s32.totalorder %v157, %v167
      %v169 = vsel %vm168, %v164, 0.0
      %vm170 = vcmask 261120
      %v171 = vsel %vm170, %v169, 0.0
      %172 = vadd.xlane.f32.xlu0 %v171
      %v173 = vpop.xlane.xlu0 %172
      %v174 = vsel %vm170, %v164, 0.0
      %175 = vadd.xlane.f32.xlu0 %v174
      %v176 = vpop.xlane.xlu0 %175
      %v177 = vmul.f32 %v176, 0.0033333334
      %v178 = vmul.f32 %v173, 0.89666665
      %v179 = vadd.f32 %v177, %v178
      %vm180 = vcmp.lt.s32.totalorder %v162, 16
      %vm181 = vcmp.ne.s32.totalorder %v155, 0
      %vm182 = vmand %vm180, %vm181
      %v183 = vsub.f32 -0.66520274, %v179
      %v184 = vsel %vm182, %v183, 0.0
      %vm185 = vcmask 7168
      %v186 = vsel %vm185, %v184, 0.0
      %187 = vadd.xlane.f32.xlu0 %v186
      %v188 = vpop.xlane.xlu0 %187
      %v189 = vrot.slane %v188, 4
      %v190 = vadd.f32 %v188, %v189
      %v191 = vrot.slane %v190, 2
      %v192 = vadd.f32 %v190, %v191
      %v193 = vrot.slane %v192, 1
      %v194 = vadd.f32 %v192, %v193
      %s195 = vtos %v194
      %v196 = vstv %s195
      %vm197 = vcmask 0
      %198 = vst.msk [vmem:[%s153] sm:$0x1] %vm197, %v196
      %p199 = scmp.lt.s32.totalorder %s13, 1
      %s200 = scalar_select %p199, %s13, 1
      %s201 = scalar_lea.vmem %s2, %s200
      // Predicated region
      $region29: #{tpu_custom_call.1} parent=27 // pred_check
        %p202 = pneg %p83
      $region30: #{tpu_custom_call.1} parent=27 // pred_check_branch
        %204 = sbr.rel (%p202) target = $region32
      $region31: #{tpu_custom_call.1} parent=27 // pred_region
        _
      $region32: #{tpu_custom_call.1} parent=27 // pred_fallthru
        _
    $region28: #{tpu_custom_call.1} parent=5 // pred_fallthru
      _
    %p205 = scmp.le.s32.totalorder 2, %s8
    // Predicated region
    $region33: #{tpu_custom_call.1} parent=5 // pred_check
      %p206 = pneg %p205
    $region34: #{tpu_custom_call.1} parent=5 // pred_check_branch
      %208 = sbr.rel (%p206) target = $region36
    $region35: #{tpu_custom_call.1} parent=5 // pred_region
      %s209 = ssub.s32 %s8, 2
      // Predicated region
      $region37: #{tpu_custom_call.1} parent=35 // pred_check
        %p210 = pneg %p89
      $region38: #{tpu_custom_call.1} parent=35 // pred_check_branch
        %212 = sbr.rel (%p210) target = $region40
      $region39: #{tpu_custom_call.1} parent=35 // pred_region
        %p213 = scmp.lt.s32.totalorder %s14, 1
        %s214 = scalar_select %p213, %s14, 1
        %s215 = scalar_lea.vmem %s2, %s214
      $region40: #{tpu_custom_call.1} parent=35 // pred_fallthru
        _
    $region36: #{tpu_custom_call.1} parent=5 // pred_fallthru
      _
  $region6: #{tpu_custom_call.1} parent=0 // loop_footer
    %s12 = sadd.s32 1, %s8
  $region7: #{tpu_custom_call.1} parent=0 // loop_footer_branch
    %7 = sbr.rel target = $region3
  $region8: #{tpu_custom_call.1} parent=0 // loop_exit
    _

</llo_original>
